<compile_context>
chip_gen: v7x
topology: tpu7x:2x2x1
jax: 0.10.0
libtpu: 0.0.40
codegen_flags: <defaults>
</compile_context>

<pallas_src>
import functools
import math

import jax
import jax.numpy as jnp
from jax import lax
from jax.experimental import pallas as pl
from jax.experimental.pallas import tpu as pltpu


def _round_up(x, m):
    return ((x + m - 1) // m) * m


def _vmem_limit_bytes():
    """Generation-aware VMEM budget: ~75% of physical, capped at 96 MiB."""
    cap = 64 * 1024 * 1024  # conservative fallback (v7x per-TC VMEM)
    try:
        cap = int(pltpu.get_tpu_info().vmem_capacity_bytes)
    except Exception:
        pass
    return min((cap * 3) // 4, 96 * 1024 * 1024)


# ----------------------------------------------------------------------------
# Kernel 1: dense (H->H) + GELU + LayerNorm, fused per row-tile.
# bf16 matmul operands (x cast in-kernel), fp32 accumulator for elementwise.
# ----------------------------------------------------------------------------
def _transform_kernel(x_ref, w_ref, b_ref, gamma_ref, beta_ref, o_ref, *,
                      eps, approx_gelu, compute_dtype):
    x = x_ref[...].astype(compute_dtype)                 # in-kernel cast (free VPU filler)
    h = jnp.dot(x, w_ref[...], preferred_element_type=jnp.float32)
    h = h + b_ref[...].astype(jnp.float32)
    if approx_gelu:
        # tanh-approx GELU: tanh goes to the (otherwise idle) EUP slot.
        c = math.sqrt(2.0 / math.pi)
        h = 0.5 * h * (1.0 + jnp.tanh(c * (h + 0.044715 * h * h * h)))
    else:
        # exact GELU (PyTorch / BERT default): 0.5 * x * (1 + erf(x / sqrt(2)))
        h = 0.5 * h * (1.0 + lax.erf(h * (1.0 / math.sqrt(2.0))))
    # LayerNorm over last axis, one-pass statistics (sum & sum-of-squares).
    hidden = h.shape[-1]
    inv_h = 1.0 / float(hidden)
    mean = jnp.sum(h, axis=-1, keepdims=True) * inv_h
    mean_sq = jnp.sum(h * h, axis=-1, keepdims=True) * inv_h
    var = jnp.maximum(mean_sq - mean * mean, 0.0)
    h = (h - mean) * lax.rsqrt(var + eps)
    h = h * gamma_ref[...].astype(jnp.float32) + beta_ref[...].astype(jnp.float32)
    o_ref[...] = h.astype(o_ref.dtype)


# ----------------------------------------------------------------------------
# Kernel 2: decoder matmul (H->V) + vocab bias.
# ----------------------------------------------------------------------------
def _decoder_kernel(h_ref, w_ref, b_ref, o_ref):
    acc = jnp.dot(h_ref[...], w_ref[...], preferred_element_type=jnp.float32)
    o_ref[...] = (acc + b_ref[...].astype(jnp.float32)).astype(o_ref.dtype)


def _decoder_resident_kernel(h_ref, w_ref, b_ref, o_ref, *, tm):
    # h_ref holds the *entire* transformed h (constant block index -> fetched
    # from HBM exactly once); slice the current row tile in-kernel.
    i = pl.program_id(1)
    start = i * tm
    if tm % 8 == 0:
        start = pl.multiple_of(start, tm)
    rows = h_ref[pl.ds(start, tm), :]
    acc = jnp.dot(rows, w_ref[...], preferred_element_type=jnp.float32)
    o_ref[...] = (acc + b_ref[...].astype(jnp.float32)).astype(o_ref.dtype)


# ----------------------------------------------------------------------------
# Params
# ----------------------------------------------------------------------------
def init_params(key, hidden_size, vocab_size, dtype=jnp.float32):
    k1, k2 = jax.random.split(key)
    return {
        # stored as [in, out] (i.e. torch weight transposed)
        "w_dense": jax.random.normal(k1, (hidden_size, hidden_size), dtype) * 0.02,
        "b_dense": jnp.zeros((1, hidden_size), dtype),
        "ln_gamma": jnp.ones((1, hidden_size), dtype),
        "ln_beta": jnp.zeros((1, hidden_size), dtype),
        "w_dec": jax.random.normal(k2, (hidden_size, vocab_size), dtype) * 0.02,
        "b_vocab": jnp.zeros((1, vocab_size), dtype),  # predictions.bias
    }


def prepare_params(params, compute_dtype=jnp.bfloat16):
    """One-time weight prep (hoisted out of the per-call hot path)."""
    return {
        "w_dense": params["w_dense"].astype(compute_dtype),
        "b_dense": params["b_dense"].reshape(1, -1).astype(jnp.float32),
        "ln_gamma": params["ln_gamma"].reshape(1, -1).astype(jnp.float32),
        "ln_beta": params["ln_beta"].reshape(1, -1).astype(jnp.float32),
        "w_dec": params["w_dec"].astype(compute_dtype),
        "b_vocab": params["b_vocab"].reshape(1, -1).astype(jnp.float32),
    }


# ----------------------------------------------------------------------------
# Forward
# ----------------------------------------------------------------------------
def bert_only_mlm_head(x, prepared, *, eps=1e-12, approx_gelu=False,
                       logits_dtype=None, tm=None, tn=None, tm_transform=None):
    """x: [B, S, H] float32 -> prediction_scores: [B, S, V]."""
    B, S, H = x.shape
    V = prepared["w_dec"].shape[1]
    cdt = prepared["w_dec"].dtype
    cdt_isz = jnp.dtype(cdt).itemsize
    out_dtype = jnp.dtype(logits_dtype) if logits_dtype is not None else x.dtype
    out_isz = jnp.dtype(out_dtype).itemsize
    M = B * S

    # ---- tile selection ------------------------------------------------
    if tm is None:                      # decoder row tile (multiple of 8, or full M)
        tm = 256 if M > 256 else M
    if tn is None:                      # decoder vocab tile (multiple of 128, or full V)
        tn = 2048 if V > 2048 else V
    # h row count is a multiple of the decoder row tile, so the decoder never
    # reads out of bounds; logit stores past row M are masked by Pallas.
    M_rows = _round_up(M, tm)
    if tm_transform is None:
        tm_transform = 512 if M_rows > 512 else M_rows

    nm = M_rows // tm
    nv = pl.cdiv(V, tn)
    nt = pl.cdiv(M_rows, tm_transform)

    vmem_limit = _vmem_limit_bytes()

    # ---- stage 1: transform (dense + gelu + layernorm), bf16 h handoff ---
    x2 = x.reshape(M, H)
    if M_rows != M:
        # Rare (M not a multiple of tm): pad a few rows of x (cheap) rather
        # than ever padding/slicing the huge logits tensor.
        x2 = jnp.pad(x2, ((0, M_rows - M), (0, 0)))

    transform = pl.pallas_call(
        functools.partial(_transform_kernel, eps=eps, approx_gelu=approx_gelu,
                          compute_dtype=cdt),
        out_shape=jax.ShapeDtypeStruct((M_rows, H), cdt),
        grid_spec=pltpu.PrefetchScalarGridSpec(
            num_scalar_prefetch=0,
            grid=(nt,),
            in_specs=[
                pl.BlockSpec((tm_transform, H), lambda i: (i, 0)),  # x rows (fp32)
                pl.BlockSpec((H, H), lambda i: (0, 0)),             # dense weight [in,out]
                pl.BlockSpec((1, H), lambda i: (0, 0)),             # dense bias
                pl.BlockSpec((1, H), lambda i: (0, 0)),             # LN gamma
                pl.BlockSpec((1, H), lambda i: (0, 0)),             # LN beta
            ],
            out_specs=pl.BlockSpec((tm_transform, H), lambda i: (i, 0)),
        ),
        compiler_params=pltpu.CompilerParams(
            dimension_semantics=("parallel",),
            vmem_limit_bytes=vmem_limit),
        cost_estimate=pl.CostEstimate(
            flops=2 * M_rows * H * H + 10 * M_rows * H,
            transcendentals=M_rows * H,
            bytes_accessed=M_rows * H * 4 + M_rows * H * cdt_isz
                           + H * H * cdt_isz + 4 * H * 4),
    )
    h = transform(x2, prepared["w_dense"], prepared["b_dense"],
                  prepared["ln_gamma"], prepared["ln_beta"])

    # ---- stage 2: decoder (H -> V) with bias -----------------------------
    # Resident-h layout if the whole bf16 h (double-buffered, worst case) plus
    # the per-step weight/output blocks fit the generation-aware VMEM budget
    # (typically: yes on 128 MiB v5e/v6e, no on 64 MiB v7x).
    dec_fixed = 2 * (H * tn * cdt_isz + tm * tn * out_isz + tn * 4)
    resident_bytes = 2 * M_rows * H * cdt_isz
    use_resident = (resident_bytes + dec_fixed) <= (vmem_limit * 7) // 10

    if use_resident:
        dec_kernel = functools.partial(_decoder_resident_kernel, tm=tm)
        h_spec = pl.BlockSpec((M_rows, H), lambda j, i: (0, 0))   # constant -> fetched once
        h_hbm_bytes = M_rows * H * cdt_isz
    else:
        dec_kernel = _decoder_kernel
        h_spec = pl.BlockSpec((tm, H), lambda j, i: (i, 0))       # row tiles re-streamed nv times
        h_hbm_bytes = nv * M_rows * H * cdt_isz

    decoder = pl.pallas_call(
        dec_kernel,
        out_shape=jax.ShapeDtypeStruct((M, V), out_dtype),        # exact (M, V): no slice/copy
        grid_spec=pltpu.PrefetchScalarGridSpec(
            num_scalar_prefetch=0,
            # vocab OUTER, rows inner: the (H, tn) weight block index depends
            # only on the outer axis, so w_dec streams from HBM exactly once.
            grid=(nv, nm),
            in_specs=[
                h_spec,
                pl.BlockSpec((H, tn), lambda j, i: (0, j)),       # decoder weight [in,out]
                pl.BlockSpec((1, tn), lambda j, i: (0, j)),       # vocab bias
            ],
            out_specs=pl.BlockSpec((tm, tn), lambda j, i: (i, j)),
        ),
        compiler_params=pltpu.CompilerParams(
            # vocab axis "parallel", rows "arbitrary": a megacore split (v7x)
            # shards the vocab axis, keeping w_dec fetched once per core.
            dimension_semantics=("parallel", "arbitrary"),
            vmem_limit_bytes=vmem_limit),
        cost_estimate=pl.CostEstimate(
            flops=2 * M_rows * H * V,
            transcendentals=0,
            bytes_accessed=h_hbm_bytes + H * V * cdt_isz + M * V * out_isz),
    )
    scores = decoder(h, prepared["w_dec"], prepared["b_vocab"])
    # (M, V) -> (B, S, V) splits the leading dim only: free, no copy.
    return scores.reshape(B, S, V)


# ----------------------------------------------------------------------------
# Reference (mirrors the kernel's precision policy: bf16 operands, fp32 accum)
# ----------------------------------------------------------------------------
def _reference(x, params, eps=1e-12):
    cdt = jnp.bfloat16
    B, S, H = x.shape
    x2 = x.reshape(B * S, H).astype(cdt)
    h = jnp.dot(x2, params["w_dense"].astype(cdt),
                preferred_element_type=jnp.float32)
    h = h + params["b_dense"].reshape(-1)
    h = 0.5 * h * (1.0 + lax.erf(h / jnp.sqrt(2.0)))
    mean = jnp.mean(h, axis=-1, keepdims=True)
    var = jnp.mean((h - mean) ** 2, axis=-1, keepdims=True)
    h = (h - mean) * lax.rsqrt(var + eps)
    h = h * params["ln_gamma"].reshape(-1) + params["ln_beta"].reshape(-1)
    h = h.astype(cdt)
    s = jnp.dot(h, params["w_dec"].astype(cdt),
                preferred_element_type=jnp.float32)
    s = s + params["b_vocab"].reshape(-1)
    return s.reshape(B, S, -1).astype(x.dtype)


if __name__ == "__main__":
    B, S, H, V = 2, 8, 128, 256
    key = jax.random.PRNGKey(0)
    kx, kp = jax.random.split(key)
    x = jax.random.normal(kx, (B, S, H), jnp.float32)
    params = init_params(kp, H, V)

    prepared = prepare_params(params)          # one-time bf16 weight cast (hoisted)
    out = bert_only_mlm_head(x, prepared)
    out = jax.block_until_ready(out)

    ref = _reference(x, params)
    assert out.shape == (B, S, V)
    assert jnp.allclose(out, ref, atol=2e-2, rtol=2e-2), "mismatch vs reference"
    print("KERNEL_OK")
</pallas_src>

<mosaic_0001>
module attributes {stable_mosaic.version = 11 : i64} {
  func.func @_transform_kernel(%arg0: i32, %arg1: memref<16x128xf32, #tpu.memory_space<vmem>>, %arg2: memref<128x128xbf16, #tpu.memory_space<vmem>>, %arg3: memref<1x128xf32, #tpu.memory_space<vmem>>, %arg4: memref<1x128xf32, #tpu.memory_space<vmem>>, %arg5: memref<1x128xf32, #tpu.memory_space<vmem>>, %arg6: memref<16x128xbf16, #tpu.memory_space<vmem>>) attributes {dimension_semantics = [#tpu.dimension_semantics<parallel>], iteration_bounds = array<i64: 1>, scalar_prefetch = 0 : i64, scratch_operands = 0 : i64, tpu.core_type = #tpu.core_type<tc>, window_params = [{transform_indices = @transform_0, window_bounds = array<i64: 16, 128>}, {pipeline_mode = #tpu.pipeline_mode<synchronous>, transform_indices = @transform_1, window_bounds = array<i64: 128, 128>}, {pipeline_mode = #tpu.pipeline_mode<synchronous>, transform_indices = @transform_2, window_bounds = array<i64: 1, 128>}, {pipeline_mode = #tpu.pipeline_mode<synchronous>, transform_indices = @transform_3, window_bounds = array<i64: 1, 128>}, {pipeline_mode = #tpu.pipeline_mode<synchronous>, transform_indices = @transform_4, window_bounds = array<i64: 1, 128>}, {transform_indices = @transform_5, window_bounds = array<i64: 16, 128>}]} {
    %c0 = arith.constant 0 : index
    %c0_0 = arith.constant 0 : index
    %0 = vector.load %arg1[%c0, %c0_0] : memref<16x128xf32, #tpu.memory_space<vmem>>, vector<16x128xf32>
    %1 = arith.truncf %0 : vector<16x128xf32> to vector<16x128xbf16>
    %c0_1 = arith.constant 0 : index
    %c0_2 = arith.constant 0 : index
    %2 = vector.load %arg2[%c0_1, %c0_2] : memref<128x128xbf16, #tpu.memory_space<vmem>>, vector<128x128xbf16>
    %cst = arith.constant dense<0.000000e+00> : vector<16x128xf32>
    %3 = tpu.matmul %1, %2, %cst {dimension_numbers = #tpu.dot_dimension_numbers<[1], [0], [0], [1], [0, 0, 1, 1], [], []>} : vector<16x128xbf16>, vector<128x128xbf16>, vector<16x128xf32> -> vector<16x128xf32>
    %c0_3 = arith.constant 0 : index
    %c0_4 = arith.constant 0 : index
    %4 = vector.load %arg3[%c0_3, %c0_4] : memref<1x128xf32, #tpu.memory_space<vmem>>, vector<1x128xf32>
    %5 = vector.broadcast %4 : vector<1x128xf32> to vector<16x128xf32>
    %6 = arith.addf %3, %5 : vector<16x128xf32>
    %cst_5 = arith.constant 5.000000e-01 : f32
    %7 = vector.broadcast %cst_5 : f32 to vector<16x128xf32>
    %8 = arith.mulf %7, %6 : vector<16x128xf32>
    %cst_6 = arith.constant 0.707106769 : f32
    %9 = vector.broadcast %cst_6 : f32 to vector<16x128xf32>
    %10 = arith.mulf %6, %9 : vector<16x128xf32>
    %11 = math.erf %10 : vector<16x128xf32>
    %cst_7 = arith.constant 1.000000e+00 : f32
    %12 = vector.broadcast %cst_7 : f32 to vector<16x128xf32>
    %13 = arith.addf %12, %11 : vector<16x128xf32>
    %14 = arith.mulf %8, %13 : vector<16x128xf32>
    %cst_8 = arith.constant dense<0.000000e+00> : vector<16xf32>
    %15 = vector.multi_reduction <add>, %14, %cst_8 [1] : vector<16x128xf32> to vector<16xf32>
    %16 = vector.shape_cast %15 : vector<16xf32> to vector<16x1xf32>
    %cst_9 = arith.constant 7.812500e-03 : f32
    %17 = vector.broadcast %cst_9 : f32 to vector<16x1xf32>
    %18 = arith.mulf %16, %17 : vector<16x1xf32>
    %19 = arith.mulf %14, %14 : vector<16x128xf32>
    %cst_10 = arith.constant dense<0.000000e+00> : vector<16xf32>
    %20 = vector.multi_reduction <add>, %19, %cst_10 [1] : vector<16x128xf32> to vector<16xf32>
    %21 = vector.shape_cast %20 : vector<16xf32> to vector<16x1xf32>
    %cst_11 = arith.constant 7.812500e-03 : f32
    %22 = vector.broadcast %cst_11 : f32 to vector<16x1xf32>
    %23 = arith.mulf %21, %22 : vector<16x1xf32>
    %24 = arith.mulf %18, %18 : vector<16x1xf32>
    %25 = arith.subf %23, %24 : vector<16x1xf32>
    %cst_12 = arith.constant 0.000000e+00 : f32
    %26 = vector.broadcast %cst_12 : f32 to vector<16x1xf32>
    %27 = arith.maximumf %25, %26 : vector<16x1xf32>
    %28 = vector.broadcast %18 : vector<16x1xf32> to vector<16x128xf32>
    %29 = arith.subf %14, %28 : vector<16x128xf32>
    %cst_13 = arith.constant 9.99999996E-13 : f32
    %30 = vector.broadcast %cst_13 : f32 to vector<16x1xf32>
    %31 = arith.addf %27, %30 : vector<16x1xf32>
    %32 = math.rsqrt %31 : vector<16x1xf32>
    %33 = vector.broadcast %32 : vector<16x1xf32> to vector<16x128xf32>
    %34 = arith.mulf %29, %33 : vector<16x128xf32>
    %c0_14 = arith.constant 0 : index
    %c0_15 = arith.constant 0 : index
    %35 = vector.load %arg4[%c0_14, %c0_15] : memref<1x128xf32, #tpu.memory_space<vmem>>, vector<1x128xf32>
    %36 = vector.broadcast %35 : vector<1x128xf32> to vector<16x128xf32>
    %37 = arith.mulf %34, %36 : vector<16x128xf32>
    %c0_16 = arith.constant 0 : index
    %c0_17 = arith.constant 0 : index
    %38 = vector.load %arg5[%c0_16, %c0_17] : memref<1x128xf32, #tpu.memory_space<vmem>>, vector<1x128xf32>
    %39 = vector.broadcast %38 : vector<1x128xf32> to vector<16x128xf32>
    %40 = arith.addf %37, %39 : vector<16x128xf32>
    %41 = arith.truncf %40 : vector<16x128xf32> to vector<16x128xbf16>
    %c0_18 = arith.constant 0 : index
    %c0_19 = arith.constant 0 : index
    %42 = vector.load %arg6[%c0_18, %c0_19] : memref<16x128xbf16, #tpu.memory_space<vmem>>, vector<16x128xbf16>
    tpu.vector_store %arg6[%c0_18, %c0_19], %41 {strides = array<i32>} : memref<16x128xbf16, #tpu.memory_space<vmem>>, vector<16x128xbf16>,
    return
  }
  func.func @transform_0(%arg0: i32) -> (i32, i32) {
    %c0_i32 = arith.constant 0 : i32
    %c0_i32_0 = arith.constant 0 : i32
    return %arg0, %c0_i32 : i32, i32
  }
  func.func @transform_1(%arg0: i32) -> (i32, i32) {
    %c0_i32 = arith.constant 0 : i32
    %c0_i32_0 = arith.constant 0 : i32
    %c0_i32_1 = arith.constant 0 : i32
    return %c0_i32, %c0_i32_0 : i32, i32
  }
  func.func @transform_2(%arg0: i32) -> (i32, i32) {
    %c0_i32 = arith.constant 0 : i32
    %c0_i32_0 = arith.constant 0 : i32
    %c0_i32_1 = arith.constant 0 : i32
    return %c0_i32, %c0_i32_0 : i32, i32
  }
  func.func @transform_3(%arg0: i32) -> (i32, i32) {
    %c0_i32 = arith.constant 0 : i32
    %c0_i32_0 = arith.constant 0 : i32
    %c0_i32_1 = arith.constant 0 : i32
    return %c0_i32, %c0_i32_0 : i32, i32
  }
  func.func @transform_4(%arg0: i32) -> (i32, i32) {
    %c0_i32 = arith.constant 0 : i32
    %c0_i32_0 = arith.constant 0 : i32
    %c0_i32_1 = arith.constant 0 : i32
    return %c0_i32, %c0_i32_0 : i32, i32
  }
  func.func @transform_5(%arg0: i32) -> (i32, i32) {
    %c0_i32 = arith.constant 0 : i32
    %c0_i32_0 = arith.constant 0 : i32
    return %arg0, %c0_i32 : i32, i32
  }
}

</mosaic_0001>

<llo_original>
// kernel: tpu_custom_call.1
$region0: #{tpu_custom_call.1}
  #allocation0 [shape = 'u32[]', space=smem, size = 0x4, offset = 0x4, fixed_abs, tag = 'smem constant byte address 0x4 - core index']
  #allocation1 [shape = 'u32[144,128]{1,0:T(1,128)}', space=vmem, size = 0x12000, scoped, tag = 'internal scratch']
  %s0 = inlined_call_operand.hbm [shape: f32[16,128], index: 0, kind: input, shape index: {}]
  %s1 = inlined_call_operand.hbm [shape: bf16[128,128], index: 1, kind: input, shape index: {}]
  %s2 = inlined_call_operand.vmem [shape: f32[1,128], index: 2, kind: input, shape index: {}]
  %s3 = inlined_call_operand.vmem [shape: f32[1,128], index: 3, kind: input, shape index: {}]
  %s4 = inlined_call_operand.vmem [shape: f32[1,128], index: 4, kind: input, shape index: {}]
  %s5 = inlined_call_operand.hbm [shape: bf16[16,128], index: 5, kind: output, shape index: {}]
  %s6 = sld [smem:[#allocation0]]
  $region38: #{tpu_custom_call.1} parent=0
    _
  %s8 = ssub.s32 1, %s6
  %s9 = scalar_select 0, %s8, %s6
  $region1: #{tpu_custom_call.1} parent=0
    #allocation2 [shape = 'u8[8192]{0}', space=vmem, size = 0x2000, scoped, tag = 'input window, operand 0, single buffered']
    #allocation3 [shape = 's32[1]{0}', space=sflag, size = 0x4, scoped, tag = 'scoped memory for tpu_custom_call.1']
    #allocation4 [shape = 's32[1]{0}', space=sflag, size = 0x4, scoped, tag = 'scoped memory for tpu_custom_call.1']
    #allocation5 [shape = 'u8[32768]{0}', space=vmem, size = 0x8000, scoped, tag = 'input window, operand 1, single buffered']
    #allocation6 [shape = 's32[1]{0}', space=sflag, size = 0x4, scoped, tag = 'scoped memory for tpu_custom_call.1']
    #allocation7 [shape = 'u8[4096]{0}', space=vmem, size = 0x1000, scoped, tag = 'output window, operand 0, single buffered']
    %10 = vsyncpa [#allocation3], 0
    %11 = vsyncpa [#allocation6], 0
    %12 = vsyncpa [#allocation4], 0
    // Predicated region
    $region2: #{tpu_custom_call.1} parent=1 // pred_check
      _
    $region3: #{tpu_custom_call.1} parent=1 // pred_check_branch
      %14 = sbr.rel (0) target = $region5
    $region4: #{tpu_custom_call.1} parent=1 // pred_region
      %s16 = ssub.s32 256, 256
      %17 = vsyncadd [#allocation3], %s16
      %s18 = sshll.u32 [#allocation2], 4
      %s19 = int_to_ptr.vmem [resolvable:$true] %s18
      %24 = dma.hbm_to_vmem [thread:$0]  %s0, 256, %s19, [#allocation3], 128, 128, 8
    $region5: #{tpu_custom_call.1} parent=1 // pred_fallthru
      _
    // Predicated region
    $region6: #{tpu_custom_call.1} parent=1 // pred_check
      _
    $region7: #{tpu_custom_call.1} parent=1 // pred_check_branch
      %26 = sbr.rel (0) target = $region9
    $region8: #{tpu_custom_call.1} parent=1 // pred_region
      %s28 = ssub.s32 1024, 1024
      %29 = vsyncadd [#allocation6], %s28
      %s30 = sshll.u32 [#allocation5], 4
      %s31 = int_to_ptr.vmem [resolvable:$true] %s30
      %36 = dma.hbm_to_vmem [thread:$0]  %s1, 1024, %s31, [#allocation6], 64, 64, 4
    $region9: #{tpu_custom_call.1} parent=1 // pred_fallthru
      _
    // Predicated region
    $region10: #{tpu_custom_call.1} parent=1 // pred_check
      _
    $region11: #{tpu_custom_call.1} parent=1 // pred_check_branch
      %38 = sbr.rel (0) target = $region13
    $region12: #{tpu_custom_call.1} parent=1 // pred_region
      _
    $region13: #{tpu_custom_call.1} parent=1 // pred_fallthru
      _
    // Predicated region
    $region14: #{tpu_custom_call.1} parent=1 // pred_check
      _
    $region15: #{tpu_custom_call.1} parent=1 // pred_check_branch
      %40 = sbr.rel (0) target = $region17
    $region16: #{tpu_custom_call.1} parent=1 // pred_region
      _
    $region17: #{tpu_custom_call.1} parent=1 // pred_fallthru
      _
    // Predicated region
    $region18: #{tpu_custom_call.1} parent=1 // pred_check
      _
    $region19: #{tpu_custom_call.1} parent=1 // pred_check_branch
      %42 = sbr.rel (0) target = $region21
    $region20: #{tpu_custom_call.1} parent=1 // pred_region
      _
    $region21: #{tpu_custom_call.1} parent=1 // pred_fallthru
      _
    // Predicated region
    $region22: #{tpu_custom_call.1} parent=1 // pred_check
      _
    $region23: #{tpu_custom_call.1} parent=1 // pred_check_branch
      %44 = sbr.rel (0) target = $region25
    $region24: #{tpu_custom_call.1} parent=1 // pred_region
      %45 = dma.done [#allocation3], 256
    $region25: #{tpu_custom_call.1} parent=1 // pred_fallthru
      _
    // Predicated region
    $region26: #{tpu_custom_call.1} parent=1 // pred_check
      _
    $region27: #{tpu_custom_call.1} parent=1 // pred_check_branch
      %47 = sbr.rel (0) target = $region29
    $region28: #{tpu_custom_call.1} parent=1 // pred_region
      %48 = dma.done [#allocation6], 1024
    $region29: #{tpu_custom_call.1} parent=1 // pred_fallthru
      _
    %v50 = vld [vmem:[#allocation2] sm:$0xff]
    %v51 = vld [vmem:[#allocation2 + $0x8] sm:$0xff]
    %v52 = vpack.c.bf16 %v51, %v50
    %v53 = vld [vmem:[#allocation5] sm:$0xf]
    %v54 = vld [vmem:[#allocation5 + $0x4] sm:$0xf]
    %v55 = vld [vmem:[#allocation5 + $0x8] sm:$0xf]
    %v56 = vld [vmem:[#allocation5 + $0xc] sm:$0xf]
    %v57 = vld [vmem:[#allocation5 + $0x10] sm:$0xf]
    %v58 = vld [vmem:[#allocation5 + $0x14] sm:$0xf]
    %v59 = vld [vmem:[#allocation5 + $0x18] sm:$0xf]
    %v60 = vld [vmem:[#allocation5 + $0x1c] sm:$0xf]
    %v61 = vld [vmem:[#allocation5 + $0x20] sm:$0xf]
    %v62 = vld [vmem:[#allocation5 + $0x24] sm:$0xf]
    %v63 = vld [vmem:[#allocation5 + $0x28] sm:$0xf]
    %v64 = vld [vmem:[#allocation5 + $0x2c] sm:$0xf]
    %v65 = vld [vmem:[#allocation5 + $0x30] sm:$0xf]
    %v66 = vld [vmem:[#allocation5 + $0x34] sm:$0xf]
    %v67 = vld [vmem:[#allocation5 + $0x38] sm:$0xf]
    %v68 = vld [vmem:[#allocation5 + $0x3c] sm:$0xf]
    %v69 = vld [vmem:[%s2] sm:$0x1]
    %v71 = vlaneseq
    %v72 = vshrl.u32 %v71, 7
    %v73 = vsub.s32 0, %v72
    %v74 = vrot.slane %v69, %v73
    %v92 = vunpack.c.l.b16 %v53
    %v93 = vunpack.c.l.b16 %v54
    %v94 = vunpack.c.l.b16 %v55
    %v95 = vunpack.c.l.b16 %v56
    %v96 = vunpack.c.l.b16 %v57
    %v97 = vunpack.c.l.b16 %v58
    %v98 = vunpack.c.l.b16 %v59
    %v99 = vunpack.c.l.b16 %v60
    %v100 = vunpack.c.l.b16 %v61
    %v101 = vunpack.c.l.b16 %v62
    %v102 = vunpack.c.l.b16 %v63
    %v103 = vunpack.c.l.b16 %v64
    %v104 = vunpack.c.l.b16 %v65
    %v105 = vunpack.c.l.b16 %v66
    %v106 = vunpack.c.l.b16 %v67
    %v107 = vunpack.c.l.b16 %v68
    %v108 = vpack.c.b16 %v93, %v92
    %v109 = vpack.c.b16 %v95, %v94
    %v110 = vpack.c.b16 %v97, %v96
    %v111 = vpack.c.b16 %v99, %v98
    %v112 = vpack.c.b16 %v101, %v100
    %v113 = vpack.c.b16 %v103, %v102
    %v114 = vpack.c.b16 %v105, %v104
    %v115 = vpack.c.b16 %v107, %v106
    %124 = vmatprep.subr.bf16.mxu0 0
    %125 = vmatpush1.bf16.msra.mxu0 %v108
    %126 = vmatprep.subr.bf16.mxu0 0
    %127 = vmatpush1.bf16.msra.mxu0 %v109
    %128 = vmatprep.subr.bf16.mxu0 0
    %129 = vmatpush1.bf16.msra.mxu0 %v110
    %130 = vmatprep.subr.bf16.mxu0 0
    %131 = vmatpush1.bf16.msra.mxu0 %v111
    %132 = vmatprep.subr.bf16.mxu0 0
    %133 = vmatpush1.bf16.msra.mxu0 %v112
    %134 = vmatprep.subr.bf16.mxu0 0
    %135 = vmatpush1.bf16.msra.mxu0 %v113
    %136 = vmatprep.subr.bf16.mxu0 0
    %137 = vmatpush1.bf16.msra.mxu0 %v114
    %138 = vmatprep.subr.bf16.mxu0 0
    %139 = vmatpush1.bf16.msra.mxu0 %v115
    %140 = vmatprep.subr.bf16.mxu0 0
    %141 = vmatpush1.bf16.msra.mxu0 0
    %142 = vmatprep.subr.bf16.mxu0 0
    %143 = vmatpush1.bf16.msra.mxu0 0
    %144 = vmatprep.subr.bf16.mxu0 0
    %145 = vmatpush1.bf16.msra.mxu0 0
    %146 = vmatprep.subr.bf16.mxu0 0
    %147 = vmatpush1.bf16.msra.mxu0 0
    %148 = vmatprep.subr.bf16.mxu0 0
    %149 = vmatpush1.bf16.msra.mxu0 0
    %150 = vmatprep.subr.bf16.mxu0 0
    %151 = vmatpush1.bf16.msra.mxu0 0
    %152 = vmatprep.subr.bf16.mxu0 0
    %153 = vmatpush1.bf16.msra.mxu0 0
    %154 = vmatprep.subr.bf16.mxu0 0
    %155 = vmatpush1.bf16.msra.mxu0 0
    %156 = vmatprep.mubr.bf16.mxu0 0
    %157 = vmatmul.mubr.bf16.gmra.mrb[0].mxu0 %v52
    %v158 = vpop.f32.mrb[0].mxu0
    %v159 = vadd.f32 %v74, %v158
    %v160 = vpop.f32.mrb[0].mxu0
    %v161 = vpop.f32.mrb[0].mxu0
    %v162 = vadd.f32 %v74, %v161
    %v163 = vpop.f32.mrb[0].mxu0
    %164 = vdwg.mxu0
    %v165 = vmul.f32 %v159, 0.5
    %v166 = vmul.f32 %v162, 0.5
    %v167 = vmul.f32 %v159, 0.70710677
    %v168 = vmul.f32 %v162, 0.70710677
    %v169 = verf.f32.pop %v167
    %v170 = verf.f32.pop %v168
    %v171 = vadd.f32 %v169, 1.0
    %v172 = vadd.f32 %v170, 1.0
    %v173 = vmul.f32 %v165, %v171
    %v174 = vmul.f32 %v166, %v172
    %175 = vadd.xlane.f32.xlu0 %v173
    %v176 = vpop.xlane.xlu0 %175
    %177 = vadd.xlane.f32.xlu0 %v174
    %v178 = vpop.xlane.xlu0 %177
    %v179 = vmul.f32 %v176, 0.0078125
    %v180 = vmul.f32 %v178, 0.0078125
    %v181 = vmul.f32 %v173, %v173
    %v182 = vmul.f32 %v174, %v174
    %183 = vadd.xlane.f32.xlu0 %v181
    %v184 = vpop.xlane.xlu0 %183
    %185 = vadd.xlane.f32.xlu0 %v182
    %v186 = vpop.xlane.xlu0 %185
    %v187 = vmul.f32 %v184, 0.0078125
    %v188 = vmul.f32 %v186, 0.0078125
    %v189 = vmul.f32 %v179, %v179
    %v190 = vmul.f32 %v180, %v180
    %v191 = vsub.f32 %v187, %v189
    %v192 = vsub.f32 %v188, %v190
    %v193 = vmax.f32 %v191, 0.0
    %v194 = vmax.f32 %v192, 0.0
    %v195 = vsub.f32 %v173, %v179
    %v196 = vsub.f32 %v174, %v180
    %v197 = vadd.f32 %v193, 1e-12
    %v198 = vadd.f32 %v194, 1e-12
    %v199 = vrsqrt.pop %v197
    %v200 = vrsqrt.pop %v198
    %v201 = vmul.f32 %v195, %v199
    %v202 = vmul.f32 %v196, %v200
    %v203 = vld [vmem:[%s3] sm:$0x1]
    %v205 = vlaneseq
    %v206 = vshrl.u32 %v205, 7
    %v207 = vsub.s32 0, %v206
    %v208 = vrot.slane %v203, %v207
    %v210 = vmul.f32 %v201, %v208
    %v211 = vmul.f32 %v202, %v208
    %v212 = vld [vmem:[%s4] sm:$0x1]
    %v214 = vlaneseq
    %v215 = vshrl.u32 %v214, 7
    %v216 = vsub.s32 0, %v215
    %v217 = vrot.slane %v212, %v216
    %v219 = vadd.f32 %v210, %v217
    %v220 = vadd.f32 %v211, %v217
    %v221 = vpack.c.bf16 %v220, %v219
    %v223 = vunpack.c.l.b16 %v221
    %v224 = vunpack.c.h.b16 %v221
    %v225 = vpack.c.b16 %v223, %v223
    %v226 = vpack.c.b16 %v224, %v224
    %229 = vst [vmem:[#allocation7] sm:$0xf] %v225
    %230 = vst [vmem:[#allocation7 + $0x4] sm:$0xf] %v226
    // Predicated region
    $region30: #{tpu_custom_call.1} parent=1 // pred_check
      _
    $region31: #{tpu_custom_call.1} parent=1 // pred_check_branch
      %232 = sbr.rel (0) target = $region33
    $region32: #{tpu_custom_call.1} parent=1 // pred_region
      %s234 = ssub.s32 128, 128
      %235 = vsyncadd [#allocation4], %s234
      %s236 = sshll.u32 [#allocation7], 4
      %s237 = int_to_ptr.vmem [resolvable:$true] %s236
      %242 = dma.vmem_to_hbm [thread:$0]  %s237, 128, %s5, [#allocation4], 64, 64, 4
    $region33: #{tpu_custom_call.1} parent=1 // pred_fallthru
      _
    // Predicated region
    $region34: #{tpu_custom_call.1} parent=1 // pred_check
      _
    $region35: #{tpu_custom_call.1} parent=1 // pred_check_branch
      %244 = sbr.rel (0) target = $region37
    $region36: #{tpu_custom_call.1} parent=1 // pred_region
      %245 = dma.done [#allocation4], 128
    $region37: #{tpu_custom_call.1} parent=1 // pred_fallthru
      _
    %246 = vsyncpa [#allocation3], 1
    %247 = vsyncpa [#allocation6], 1
    %248 = vsyncpa [#allocation4], 1

</llo_original>
